<compile_context>
chip_gen: v7x
topology: tpu7x:2x2x1
jax: 0.10.0
libtpu: 0.0.40
codegen_flags: <defaults>
</compile_context>

<pallas_src>
import functools

import jax
import jax.numpy as jnp
from jax import lax
from jax.experimental import pallas as pl
from jax.experimental.pallas import tpu as pltpu


def _round_up(x, m):
    return ((x + m - 1) // m) * m


def _gcn_kernel(adj_ref, emb_ref, w_ref, b_ref, out_ref, *, denom_col):
    """One grid step processes a (batch-tile, query-row-tile) block.

    adj_ref : (Bt, Sq, Sp)   f32   adjacency rows for this tile (full Sp keys)
    emb_ref : (Bt*Sp, Fin)   f32   embeddings for the batch tile (full Sp rows)
    w_ref   : (Fin, Fp)      bf16  pre-transposed Linear weight, Fout padded to Fp
    b_ref   : (1, Fp)        f32   padded bias
    out_ref : (Bt, Sq, Fp)   out dtype, lane-dense padded output block
    """
    bt, sq, sp = adj_ref.shape
    fp = w_ref.shape[-1]

    # (1) Linear first (lane-dense Fp-wide output): y = emb @ W_pad, f32 accumulate.
    #     In-kernel f32->bf16 cast (no wrapper cast pass).
    emb_bf = emb_ref[...].astype(jnp.bfloat16)
    y = jnp.dot(emb_bf, w_ref[...], preferred_element_type=jnp.float32)  # (Bt*Sp, Fp)

    # (2) Plant a ones column in a padding lane so the batched matmul below also
    #     produces the adjacency row sums (fused denominator, no XLU reduce).
    lane = lax.broadcasted_iota(jnp.int32, y.shape, 1)
    y = jnp.where(lane == denom_col, 1.0, y)

    # (3) Batched adj @ y on the MXU, f32 accumulation.  The reshape is a layout
    #     no-op: rows split on a multiple of 8 sublanes, lanes stay 128-dense.
    y3 = y.reshape(bt, sp, fp).astype(jnp.bfloat16)
    adj_bf = adj_ref[...].astype(jnp.bfloat16)
    h = jnp.einsum("bij,bjf->bif", adj_bf, y3,
                   preferred_element_type=jnp.float32)                    # (Bt, Sq, Fp)

    # (4) Normalize: denom = rowsum(adj) + 1 comes from the planted column.
    denom = h[:, :, denom_col:denom_col + 1] + 1.0                        # (Bt, Sq, 1)
    inv = pl.reciprocal(denom, approx=True)                               # EUP slot

    out_ref[...] = ((h + b_ref[...]) * inv).astype(out_ref.dtype)


def _vmem_limit_bytes():
    """Generation-aware scoped-VMEM request: half the physical capacity,
    capped at 64 MiB (=> 32 MiB on v7x's 64 MiB cores, 64 MiB on v5e/v6e)."""
    cap = 64 * 1024 * 1024  # conservative default (v7x per-core VMEM)
    try:
        info = pltpu.get_tpu_info()
        cap = int(getattr(info, "vmem_capacity_bytes", cap)) or cap
    except Exception:
        pass
    return min(cap // 2, 64 * 1024 * 1024)


def _choose_tiles(B, Sp, Fin, Fp, budget):
    """Pick (batch tile Bt, query-row tile Sq) so the per-step working set
    (double-buffered adj/emb/out tiles + weight/bias + f32 intermediates)
    fits in `budget`, keeping >=2 grid steps when B allows (megacore/pipeline)."""

    def step_bytes(bt, sq):
        adj_b = bt * sq * Sp * 4          # f32 adjacency tile
        emb_b = bt * Sp * Fin * 4         # f32 embedding tile (full Sp rows)
        out_b = bt * sq * Fp * 4          # output tile (f32 upper bound)
        w_b = Fin * Fp * 2 + Fp * 4       # weight (bf16) + bias (f32)
        interm = bt * Sp * Fp * 4 + bt * sq * Fp * 4   # y + h f32 temporaries
        return 2 * (adj_b + emb_b + out_b) + 2 * w_b + interm

    # Batch tile: as large as fits, but leave >=2 grid steps when B >= 2 so the
    # second TensorCore (v7x) and the prefetch pipeline have work to overlap.
    bt = B if B < 2 else max(1, B // 2)
    while bt > 1 and step_bytes(bt, Sp) > budget:
        bt = (bt + 1) // 2

    # Row tile: full sequence if it fits, otherwise halve (multiple of 8 rows).
    sq = Sp
    while sq > 8 and step_bytes(bt, sq) > budget:
        sq = _round_up(max(8, sq // 2), 8)

    # TODO(synk): tile the K = S contraction (f32 accumulator + pl.when
    # init/finalize on an "arbitrary" axis) for sequences so long that even a
    # single 8-row adjacency slab exceeds the VMEM budget.
    return bt, sq


def gcn_forward(sentence_embedding, adjacency_matrix, weight, bias):
    """sentence_embedding: (B, S, Fin) f32
       adjacency_matrix  : (B, S, S)   f32
       weight            : (Fout, Fin) (PyTorch nn.Linear layout)
       bias              : (Fout,)
    """
    B, S, Fin = sentence_embedding.shape
    Fout, Fin_w = weight.shape
    assert Fin_w == Fin, "weight shape must be (out_features, in_features)"
    out_dtype = sentence_embedding.dtype

    # Lane-dense padded output width, with one spare lane for the fused denom.
    Fp = max(128, _round_up(Fout, 128))
    if Fp == Fout:
        Fp += 128
    denom_col = Fout  # first padding lane carries the adjacency row sums

    # Tiny parameter prep (one-time, negligible): (Fin, Fp) bf16 weight, f32 bias.
    w_t = jnp.zeros((Fin, Fp), jnp.bfloat16).at[:, :Fout].set(
        jnp.transpose(weight).astype(jnp.bfloat16))
    b2d = jnp.zeros((1, Fp), jnp.float32).at[:, :Fout].set(bias.astype(jnp.float32))

    # Pad S to a sublane multiple so in-kernel reshapes are layout no-ops.
    Sp = _round_up(S, 8)
    vmem_limit = _vmem_limit_bytes()
    Bt, Sq = _choose_tiles(B, Sp, Fin, Fp, (vmem_limit * 3) // 4)
    B_pad = _round_up(B, Bt)

    adj = adjacency_matrix
    emb = sentence_embedding
    if (B_pad, Sp) != (B, S):
        adj = jnp.pad(adj, ((0, B_pad - B), (0, Sp - S), (0, Sp - S)))
        emb = jnp.pad(emb, ((0, B_pad - B), (0, Sp - S), (0, 0)))
    emb2d = emb.reshape(B_pad * Sp, Fin)  # free row-major reshape (wrapper side)

    grid = (B_pad // Bt, Sp // Sq)
    kernel = functools.partial(_gcn_kernel, denom_col=denom_col)

    def run(single_buffer_params):
        def const_spec(shape):
            # Weight / bias: constant block index -> stay VMEM-resident.
            if single_buffer_params:
                return pl.BlockSpec(shape, lambda b, r: (0, 0),
                                    pipeline_mode=pl.Buffered(1))
            return pl.BlockSpec(shape, lambda b, r: (0, 0))

        return pl.pallas_call(
            kernel,
            out_shape=jax.ShapeDtypeStruct((B_pad, Sp, Fp), out_dtype),
            grid_spec=pltpu.PrefetchScalarGridSpec(
                num_scalar_prefetch=0,
                grid=grid,
                in_specs=[
                    pl.BlockSpec((Bt, Sq, Sp), lambda b, r: (b, r, 0)),
                    pl.BlockSpec((Bt * Sp, Fin), lambda b, r: (b, 0)),
                    const_spec((Fin, Fp)),
                    const_spec((1, Fp)),
                ],
                out_specs=pl.BlockSpec((Bt, Sq, Fp), lambda b, r: (b, r, 0)),
            ),
            compiler_params=pltpu.CompilerParams(
                dimension_semantics=("parallel", "parallel"),
                vmem_limit_bytes=vmem_limit,
            ),
        )(adj, emb2d, w_t, b2d)

    try:
        out3 = run(single_buffer_params=True)
    except Exception:
        # pl.Buffered(1) single-buffering is a newer knob; fall back to the
        # default pipeline mode if this JAX build rejects it.
        out3 = run(single_buffer_params=False)

    # Crop padding (a consumer could consume the padded slab directly instead).
    return out3[:B, :S, :Fout]


def gcn_reference(sentence_embedding, adjacency_matrix, weight, bias):
    tw = jnp.einsum("bij,bjf->bif", adjacency_matrix, sentence_embedding)
    hidden = jnp.einsum("bif,of->bio", tw, weight) + bias
    denom = jnp.sum(adjacency_matrix, axis=2, keepdims=True) + 1.0
    return hidden / denom


if __name__ == "__main__":
    # Small shapes consistent with the module's forward.
    B, S = 2, 8
    IN_FEATURES, OUT_FEATURES = 32, 32

    key = jax.random.PRNGKey(0)
    k_emb, k_adj, k_w, k_b = jax.random.split(key, 4)

    sentence_embedding = jax.random.normal(k_emb, (B, S, IN_FEATURES), jnp.float32)
    # Non-negative 0/1 adjacency so denom is well behaved (and exact in bf16).
    adjacency_matrix = (jax.random.uniform(k_adj, (B, S, S), jnp.float32) > 0.5
                        ).astype(jnp.float32)

    # Deterministic synthetic nn.Linear(in_features, out_features) parameters.
    weight = jax.random.normal(k_w, (OUT_FEATURES, IN_FEATURES), jnp.float32) * 0.1
    bias = jax.random.normal(k_b, (OUT_FEATURES,), jnp.float32) * 0.1

    out = gcn_forward(sentence_embedding, adjacency_matrix, weight, bias)
    out = jax.block_until_ready(out)

    ref = gcn_reference(sentence_embedding, adjacency_matrix, weight, bias)
    assert out.shape == (B, S, OUT_FEATURES)
    # bf16 MXU inputs + approx reciprocal -> relaxed tolerance vs. f32 reference.
    assert jnp.allclose(out, ref, atol=2e-2, rtol=2e-2), float(
        jnp.max(jnp.abs(out - ref)))

    print("KERNEL_OK")
</pallas_src>

<mosaic_0001>
module attributes {stable_mosaic.version = 11 : i64} {
  func.func @_gcn_kernel(%arg0: i32, %arg1: i32, %arg2: memref<1x8x8xf32, #tpu.memory_space<vmem>>, %arg3: memref<8x32xf32, #tpu.memory_space<vmem>>, %arg4: memref<32x128xbf16, #tpu.memory_space<vmem>>, %arg5: memref<1x128xf32, #tpu.memory_space<vmem>>, %arg6: memref<1x8x128xf32, #tpu.memory_space<vmem>>) attributes {dimension_semantics = [#tpu.dimension_semantics<parallel>, #tpu.dimension_semantics<parallel>], iteration_bounds = array<i64: 2, 1>, scalar_prefetch = 0 : i64, scratch_operands = 0 : i64, tpu.core_type = #tpu.core_type<tc>, window_params = [{transform_indices = @transform_0, window_bounds = array<i64: 1, 8, 8>}, {transform_indices = @transform_1, window_bounds = array<i64: 8, 32>}, {pipeline_mode = #tpu.pipeline_mode<synchronous>, transform_indices = @transform_2, window_bounds = array<i64: 32, 128>}, {pipeline_mode = #tpu.pipeline_mode<synchronous>, transform_indices = @transform_3, window_bounds = array<i64: 1, 128>}, {transform_indices = @transform_4, window_bounds = array<i64: 1, 8, 128>}]} {
    %c0 = arith.constant 0 : index
    %c0_0 = arith.constant 0 : index
    %0 = vector.load %arg3[%c0, %c0_0] : memref<8x32xf32, #tpu.memory_space<vmem>>, vector<8x32xf32>
    %1 = arith.truncf %0 : vector<8x32xf32> to vector<8x32xbf16>
    %c0_1 = arith.constant 0 : index
    %c0_2 = arith.constant 0 : index
    %2 = vector.load %arg4[%c0_1, %c0_2] : memref<32x128xbf16, #tpu.memory_space<vmem>>, vector<32x128xbf16>
    %cst = arith.constant dense<0.000000e+00> : vector<8x128xf32>
    %3 = tpu.matmul %1, %2, %cst {dimension_numbers = #tpu.dot_dimension_numbers<[1], [0], [0], [1], [0, 0, 1, 1], [], []>} : vector<8x32xbf16>, vector<32x128xbf16>, vector<8x128xf32> -> vector<8x128xf32>
    %4 = tpu.iota {dimensions = array<i32: 1>} : vector<8x128xi32>
    %c32_i32 = arith.constant 32 : i32
    %5 = vector.broadcast %c32_i32 : i32 to vector<8x128xi32>
    %6 = arith.cmpi eq, %4, %5 : vector<8x128xi32>
    %cst_3 = arith.constant 1.000000e+00 : f32
    %7 = vector.broadcast %cst_3 : f32 to vector<8x128xf32>
    %8 = arith.select %6, %7, %3 : vector<8x128xi1>, vector<8x128xf32>
    %9 = vector.shape_cast %8 : vector<8x128xf32> to vector<1x8x128xf32>
    %10 = arith.truncf %9 : vector<1x8x128xf32> to vector<1x8x128xbf16>
    %c0_4 = arith.constant 0 : index
    %c0_5 = arith.constant 0 : index
    %c0_6 = arith.constant 0 : index
    %11 = vector.load %arg2[%c0_4, %c0_5, %c0_6] : memref<1x8x8xf32, #tpu.memory_space<vmem>>, vector<1x8x8xf32>
    %12 = arith.truncf %11 : vector<1x8x8xf32> to vector<1x8x8xbf16>
    "tpu.trace_start"() <{level = 10 : i32, message = "bij,bjf->bif"}> : () -> ()
    %cst_7 = arith.constant dense<0.000000e+00> : vector<1x8x128xf32>
    %13 = tpu.matmul %12, %10, %cst_7 {dimension_numbers = #tpu.dot_dimension_numbers<[2], [1], [1], [2], [0, 0, 0, 1, 1, 2], [0], [0]>} : vector<1x8x8xbf16>, vector<1x8x128xbf16>, vector<1x8x128xf32> -> vector<1x8x128xf32>
    "tpu.trace_stop"() : () -> ()
    %14 = vector.extract_strided_slice %13 {offsets = [0, 0, 32], sizes = [1, 8, 1], strides = [1, 1, 1]} : vector<1x8x128xf32> to vector<1x8x1xf32>
    %cst_8 = arith.constant 1.000000e+00 : f32
    %15 = vector.broadcast %cst_8 : f32 to vector<1x8x1xf32>
    %16 = arith.addf %14, %15 : vector<1x8x1xf32>
    %17 = tpu.reciprocal %16 {approx = true} : vector<1x8x1xf32> -> vector<1x8x1xf32>
    %c0_9 = arith.constant 0 : index
    %c0_10 = arith.constant 0 : index
    %18 = vector.load %arg5[%c0_9, %c0_10] : memref<1x128xf32, #tpu.memory_space<vmem>>, vector<1x128xf32>
    %19 = vector.shape_cast %18 : vector<1x128xf32> to vector<1x1x128xf32>
    %20 = vector.broadcast %19 : vector<1x1x128xf32> to vector<1x8x128xf32>
    %21 = arith.addf %13, %20 : vector<1x8x128xf32>
    %22 = vector.broadcast %17 : vector<1x8x1xf32> to vector<1x8x128xf32>
    %23 = arith.mulf %21, %22 : vector<1x8x128xf32>
    %c0_11 = arith.constant 0 : index
    %c0_12 = arith.constant 0 : index
    %c0_13 = arith.constant 0 : index
    %24 = vector.load %arg6[%c0_11, %c0_12, %c0_13] : memref<1x8x128xf32, #tpu.memory_space<vmem>>, vector<1x8x128xf32>
    tpu.vector_store %arg6[%c0_11, %c0_12, %c0_13], %23 {strides = array<i32>} : memref<1x8x128xf32, #tpu.memory_space<vmem>>, vector<1x8x128xf32>,
    return
  }
  func.func @transform_0(%arg0: i32, %arg1: i32) -> (i32, i32, i32) {
    %c0_i32 = arith.constant 0 : i32
    %c0_i32_0 = arith.constant 0 : i32
    return %arg0, %arg1, %c0_i32 : i32, i32, i32
  }
  func.func @transform_1(%arg0: i32, %arg1: i32) -> (i32, i32) {
    %c0_i32 = arith.constant 0 : i32
    %c0_i32_0 = arith.constant 0 : i32
    return %arg0, %c0_i32 : i32, i32
  }
  func.func @transform_2(%arg0: i32, %arg1: i32) -> (i32, i32) {
    %c0_i32 = arith.constant 0 : i32
    %c0_i32_0 = arith.constant 0 : i32
    %c0_i32_1 = arith.constant 0 : i32
    return %c0_i32, %c0_i32_0 : i32, i32
  }
  func.func @transform_3(%arg0: i32, %arg1: i32) -> (i32, i32) {
    %c0_i32 = arith.constant 0 : i32
    %c0_i32_0 = arith.constant 0 : i32
    %c0_i32_1 = arith.constant 0 : i32
    return %c0_i32, %c0_i32_0 : i32, i32
  }
  func.func @transform_4(%arg0: i32, %arg1: i32) -> (i32, i32, i32) {
    %c0_i32 = arith.constant 0 : i32
    %c0_i32_0 = arith.constant 0 : i32
    return %arg0, %arg1, %c0_i32 : i32, i32, i32
  }
}

module attributes {stable_mosaic.version = 11 : i64} {
  func.func @_gcn_kernel(%arg0: i32, %arg1: i32, %arg2: memref<1x8x8xf32, #tpu.memory_space<vmem>>, %arg3: memref<8x32xf32, #tpu.memory_space<vmem>>, %arg4: memref<32x128xbf16, #tpu.memory_space<vmem>>, %arg5: memref<1x128xf32, #tpu.memory_space<vmem>>, %arg6: memref<1x8x128xf32, #tpu.memory_space<vmem>>) attributes {dimension_semantics = [#tpu.dimension_semantics<parallel>, #tpu.dimension_semantics<parallel>], iteration_bounds = array<i64: 2, 1>, scalar_prefetch = 0 : i64, scratch_operands = 0 : i64, tpu.core_type = #tpu.core_type<tc>, window_params = [{transform_indices = @transform_0, window_bounds = array<i64: 1, 8, 8>}, {transform_indices = @transform_1, window_bounds = array<i64: 8, 32>}, {pipeline_mode = #tpu.pipeline_mode<synchronous>, transform_indices = @transform_2, window_bounds = array<i64: 32, 128>}, {pipeline_mode = #tpu.pipeline_mode<synchronous>, transform_indices = @transform_3, window_bounds = array<i64: 1, 128>}, {transform_indices = @transform_4, window_bounds = array<i64: 1, 8, 128>}]} {
    %c0 = arith.constant 0 : index
    %c0_0 = arith.constant 0 : index
    %0 = vector.load %arg3[%c0, %c0_0] : memref<8x32xf32, #tpu.memory_space<vmem>>, vector<8x32xf32>
    %1 = arith.truncf %0 : vector<8x32xf32> to vector<8x32xbf16>
    %c0_1 = arith.constant 0 : index
    %c0_2 = arith.constant 0 : index
    %2 = vector.load %arg4[%c0_1, %c0_2] : memref<32x128xbf16, #tpu.memory_space<vmem>>, vector<32x128xbf16>
    %cst = arith.constant dense<0.000000e+00> : vector<8x128xf32>
    %3 = tpu.matmul %1, %2, %cst {dimension_numbers = #tpu.dot_dimension_numbers<[1], [0], [0], [1], [0, 0, 1, 1], [], []>} : vector<8x32xbf16>, vector<32x128xbf16>, vector<8x128xf32> -> vector<8x128xf32>
    %4 = tpu.iota {dimensions = array<i32: 1>} : vector<8x128xi32>
    %c32_i32 = arith.constant 32 : i32
    %5 = vector.broadcast %c32_i32 : i32 to vector<8x128xi32>
    %6 = arith.cmpi eq, %4, %5 : vector<8x128xi32>
    %cst_3 = arith.constant 1.000000e+00 : f32
    %7 = vector.broadcast %cst_3 : f32 to vector<8x128xf32>
    %8 = arith.select %6, %7, %3 : vector<8x128xi1>, vector<8x128xf32>
    %9 = vector.shape_cast %8 : vector<8x128xf32> to vector<1x8x128xf32>
    %10 = arith.truncf %9 : vector<1x8x128xf32> to vector<1x8x128xbf16>
    %c0_4 = arith.constant 0 : index
    %c0_5 = arith.constant 0 : index
    %c0_6 = arith.constant 0 : index
    %11 = vector.load %arg2[%c0_4, %c0_5, %c0_6] : memref<1x8x8xf32, #tpu.memory_space<vmem>>, vector<1x8x8xf32>
    %12 = arith.truncf %11 : vector<1x8x8xf32> to vector<1x8x8xbf16>
    "tpu.trace_start"() <{level = 10 : i32, message = "bij,bjf->bif"}> : () -> ()
    %cst_7 = arith.constant dense<0.000000e+00> : vector<1x8x128xf32>
    %13 = tpu.matmul %12, %10, %cst_7 {dimension_numbers = #tpu.dot_dimension_numbers<[2], [1], [1], [2], [0, 0, 0, 1, 1, 2], [0], [0]>} : vector<1x8x8xbf16>, vector<1x8x128xbf16>, vector<1x8x128xf32> -> vector<1x8x128xf32>
    "tpu.trace_stop"() : () -> ()
    %14 = vector.extract_strided_slice %13 {offsets = [0, 0, 32], sizes = [1, 8, 1], strides = [1, 1, 1]} : vector<1x8x128xf32> to vector<1x8x1xf32>
    %cst_8 = arith.constant 1.000000e+00 : f32
    %15 = vector.broadcast %cst_8 : f32 to vector<1x8x1xf32>
    %16 = arith.addf %14, %15 : vector<1x8x1xf32>
    %17 = tpu.reciprocal %16 {approx = true} : vector<1x8x1xf32> -> vector<1x8x1xf32>
    %c0_9 = arith.constant 0 : index
    %c0_10 = arith.constant 0 : index
    %18 = vector.load %arg5[%c0_9, %c0_10] : memref<1x128xf32, #tpu.memory_space<vmem>>, vector<1x128xf32>
    %19 = vector.shape_cast %18 : vector<1x128xf32> to vector<1x1x128xf32>
    %20 = vector.broadcast %19 : vector<1x1x128xf32> to vector<1x8x128xf32>
    %21 = arith.addf %13, %20 : vector<1x8x128xf32>
    %22 = vector.broadcast %17 : vector<1x8x1xf32> to vector<1x8x128xf32>
    %23 = arith.mulf %21, %22 : vector<1x8x128xf32>
    %c0_11 = arith.constant 0 : index
    %c0_12 = arith.constant 0 : index
    %c0_13 = arith.constant 0 : index
    %24 = vector.load %arg6[%c0_11, %c0_12, %c0_13] : memref<1x8x128xf32, #tpu.memory_space<vmem>>, vector<1x8x128xf32>
    tpu.vector_store %arg6[%c0_11, %c0_12, %c0_13], %23 {strides = array<i32>} : memref<1x8x128xf32, #tpu.memory_space<vmem>>, vector<1x8x128xf32>,
    return
  }
  func.func @transform_0(%arg0: i32, %arg1: i32) -> (i32, i32, i32) {
    %c0_i32 = arith.constant 0 : i32
    %c0_i32_0 = arith.constant 0 : i32
    return %arg0, %arg1, %c0_i32 : i32, i32, i32
  }
  func.func @transform_1(%arg0: i32, %arg1: i32) -> (i32, i32) {
    %c0_i32 = arith.constant 0 : i32
    %c0_i32_0 = arith.constant 0 : i32
    return %arg0, %c0_i32 : i32, i32
  }
  func.func @transform_2(%arg0: i32, %arg1: i32) -> (i32, i32) {
    %c0_i32 = arith.constant 0 : i32
    %c0_i32_0 = arith.constant 0 : i32
    %c0_i32_1 = arith.constant 0 : i32
    return %c0_i32, %c0_i32_0 : i32, i32
  }
  func.func @transform_3(%arg0: i32, %arg1: i32) -> (i32, i32) {
    %c0_i32 = arith.constant 0 : i32
    %c0_i32_0 = arith.constant 0 : i32
    %c0_i32_1 = arith.constant 0 : i32
    return %c0_i32, %c0_i32_0 : i32, i32
  }
  func.func @transform_4(%arg0: i32, %arg1: i32) -> (i32, i32, i32) {
    %c0_i32 = arith.constant 0 : i32
    %c0_i32_0 = arith.constant 0 : i32
    return %arg0, %arg1, %c0_i32 : i32, i32, i32
  }
}

</mosaic_0001>

<llo_original>
// kernel: tpu_custom_call.1
$region0: #{tpu_custom_call.1}
  #allocation0 [shape = 'u32[]', space=smem, size = 0x4, offset = 0x4, fixed_abs, tag = 'smem constant byte address 0x4 - core index']
  #allocation1 [shape = 'u32[144,128]{1,0:T(1,128)}', space=vmem, size = 0x12000, scoped, tag = 'internal scratch']
  %s0 = inlined_call_operand.hbm [shape: f32[2,8,8], index: 0, kind: input, shape index: {}]
  %s1 = inlined_call_operand.hbm [shape: f32[16,32], index: 1, kind: input, shape index: {}]
  %s2 = inlined_call_operand.hbm [shape: bf16[32,128], index: 2, kind: input, shape index: {}]
  %s3 = inlined_call_operand.vmem [shape: f32[1,128], index: 3, kind: input, shape index: {}]
  %s4 = inlined_call_operand.hbm [shape: f32[2,8,128], index: 4, kind: output, shape index: {}]
  %s5 = sld [smem:[#allocation0]]
  $region61: #{tpu_custom_call.1} parent=0
    _
  %s7 = ssub.s32 1, %s5
  %s8 = scalar_select 0, %s7, %s5
  $region1: #{tpu_custom_call.1} parent=0
    #allocation2 [shape = 'u8[8192]{0}', space=vmem, size = 0x2000, scoped, tag = 'input window, operand 0']
    #allocation3 [shape = 's32[2]{0}', space=sflag, size = 0x8, scoped, tag = 'scoped memory for tpu_custom_call.1']
    #allocation4 [shape = 's32[2]{0}', space=sflag, size = 0x8, scoped, tag = 'scoped memory for tpu_custom_call.1']
    #allocation5 [shape = 'u8[8192]{0}', space=vmem, size = 0x2000, scoped, tag = 'input window, operand 1']
    #allocation6 [shape = 's32[2]{0}', space=sflag, size = 0x8, scoped, tag = 'scoped memory for tpu_custom_call.1']
    #allocation7 [shape = 'u8[8192]{0}', space=vmem, size = 0x2000, scoped, tag = 'input window, operand 2, single buffered']
    #allocation8 [shape = 'u8[8192]{0}', space=vmem, size = 0x2000, scoped, tag = 'output window, operand 0']
    %9 = vsyncpa [#allocation3], 0
    %s10 = scalar_lea.sflag [#allocation3], 1
    %11 = vsyncpa %s10, 0
    %12 = vsyncpa [#allocation6], 0
    %s13 = scalar_lea.sflag [#allocation6], 1
    %14 = vsyncpa %s13, 0
    %15 = vsyncpa [#allocation4], 0
    %s16 = scalar_lea.sflag [#allocation4], 1
    %17 = vsyncpa %s16, 0
    loop: start=0, step=1, limit=4
    $region2: #{tpu_custom_call.1} parent=1 // loop_pre_header
      _
    $region3: #{tpu_custom_call.1} parent=1 // loop_header
      %s19 = sphi 0, %s23
      %p20 = scmp.ge.s32.totalorder %s19, 4
      %s26 = sphi 0, %s38
      %s27 = sphi 0, %s34
      %s28 = sphi 0, %s26
      %s29 = sphi 0, %s27
      %s30 = sphi 0, %s28
      %s31 = sphi 0, %s29
      %s43 = sphi 0, %s45
      %s46 = sphi 0, %s43
      %s47 = sphi 0, %s46
      %s63 = sphi 0, %s47
      %s69 = sphi 0, %s71
      %s72 = sphi 0, %s69
      %s73 = sphi 0, %s72
      %s89 = sphi 0, %s73
      %s93 = sphi 0, %s93
      %s95 = sphi 0, %s93
      %s96 = sphi 0, %s95
      %s110 = sphi 0, %s96
      %s114 = sphi 0, %s114
      %s116 = sphi 0, %s114
      %s117 = sphi 0, %s116
      %s131 = sphi 0, %s117
      %s139 = sphi 0, %s141
      %s142 = sphi 0, %s139
      %s143 = sphi 0, %s142
      %s159 = sphi 0, %s143
    $region4: #{tpu_custom_call.1} parent=1 // loop_header_branch
      %22 = sbr.rel (%p20) target = $region8
    $region5: #{tpu_custom_call.1} parent=1 // loop_body
      %s24 = ssub.s32 %s19, 1
      %s25 = ssub.s32 %s19, 2
      %s32 = sadd.s32 1, %s27
      %p33 = scmp.ge.s32.totalorder %s32, 1
      %s34 = scalar_select %p33, 0, %s32
      %s35 = sadd.s32 1, %s26
      %s36 = scalar_select %p33, %s35, %s26
      %p37 = scmp.ge.s32.totalorder %s36, 2
      %s38 = scalar_select %p37, 0, %s36
      %s39 = ssub.s32 %s26, %s38
      %s40 = ssub.s32 %s27, %s34
      %s41 = sor.u32 %s39, %s40
      %p42 = scmp.eq.s32.totalorder %s41, 0
      %s44 = sadd.s32 %s43, 1
      %s45 = scalar_select %p42, %s43, %s44
      %p48 = pneg %p42
      %p49 = scmp.eq.s32.totalorder %s19, 1
      %p50 = por %p48, %p49
      %p51 = scmp.ne.s32.totalorder %s43, %s46
      %p52 = scmp.eq.s32.totalorder %s19, 0
      %p53 = por %p51, %p52
      %p54 = scmp.ne.s32.totalorder %s43, %s46
      %p55 = scmp.eq.s32.totalorder %s24, 1
      %p56 = por %p54, %p55
      %p57 = scmp.ne.s32.totalorder %s46, %s47
      %p58 = scmp.eq.s32.totalorder %s24, 0
      %p59 = por %p57, %p58
      %p60 = scmp.ne.s32.totalorder %s46, %s47
      %p61 = scmp.eq.s32.totalorder %s25, 1
      %p62 = por %p60, %p61
      %p64 = scmp.ne.s32.totalorder %s47, %s63
      %p65 = scmp.eq.s32.totalorder %s25, 0
      %p66 = por %p64, %p65
      %s67 = ssub.s32 %s26, %s38
      %p68 = scmp.eq.s32.totalorder %s67, 0
      %s70 = sadd.s32 %s69, 1
      %s71 = scalar_select %p68, %s69, %s70
      %p74 = pneg %p68
      %p75 = scmp.eq.s32.totalorder %s19, 1
      %p76 = por %p74, %p75
      %p77 = scmp.ne.s32.totalorder %s69, %s72
      %p78 = scmp.eq.s32.totalorder %s19, 0
      %p79 = por %p77, %p78
      %p80 = scmp.ne.s32.totalorder %s69, %s72
      %p81 = scmp.eq.s32.totalorder %s24, 1
      %p82 = por %p80, %p81
      %p83 = scmp.ne.s32.totalorder %s72, %s73
      %p84 = scmp.eq.s32.totalorder %s24, 0
      %p85 = por %p83, %p84
      %p86 = scmp.ne.s32.totalorder %s72, %s73
      %p87 = scmp.eq.s32.totalorder %s25, 1
      %p88 = por %p86, %p87
      %p90 = scmp.ne.s32.totalorder %s73, %s89
      %p91 = scmp.eq.s32.totalorder %s25, 0
      %p92 = por %p90, %p91
      %s94 = sadd.s32 %s93, 1
      %p97 = scmp.eq.s32.totalorder %s19, 1
      %p98 = scmp.ne.s32.totalorder %s93, %s95
      %p99 = scmp.eq.s32.totalorder %s19, 0
      %p100 = por %p98, %p99
      %p101 = scmp.ne.s32.totalorder %s93, %s95
      %p102 = scmp.eq.s32.totalorder %s24, 1
      %p103 = por %p101, %p102
      %p104 = scmp.ne.s32.totalorder %s95, %s96
      %p105 = scmp.eq.s32.totalorder %s24, 0
      %p106 = por %p104, %p105
      %p107 = scmp.ne.s32.totalorder %s95, %s96
      %p108 = scmp.eq.s32.totalorder %s25, 1
      %p109 = por %p107, %p108
      %p111 = scmp.ne.s32.totalorder %s96, %s110
      %p112 = scmp.eq.s32.totalorder %s25, 0
      %p113 = por %p111, %p112
      %s115 = sadd.s32 %s114, 1
      %p118 = scmp.eq.s32.totalorder %s19, 1
      %p119 = scmp.ne.s32.totalorder %s114, %s116
      %p120 = scmp.eq.s32.totalorder %s19, 0
      %p121 = por %p119, %p120
      %p122 = scmp.ne.s32.totalorder %s114, %s116
      %p123 = scmp.eq.s32.totalorder %s24, 1
      %p124 = por %p122, %p123
      %p125 = scmp.ne.s32.totalorder %s116, %s117
      %p126 = scmp.eq.s32.totalorder %s24, 0
      %p127 = por %p125, %p126
      %p128 = scmp.ne.s32.totalorder %s116, %s117
      %p129 = scmp.eq.s32.totalorder %s25, 1
      %p130 = por %p128, %p129
      %p132 = scmp.ne.s32.totalorder %s117, %s131
      %p133 = scmp.eq.s32.totalorder %s25, 0
      %p134 = por %p132, %p133
      %s135 = ssub.s32 %s26, %s38
      %s136 = ssub.s32 %s27, %s34
      %s137 = sor.u32 %s135, %s136
      %p138 = scmp.eq.s32.totalorder %s137, 0
      %s140 = sadd.s32 %s139, 1
      %s141 = scalar_select %p138, %s139, %s140
      %p144 = pneg %p138
      %p145 = scmp.eq.s32.totalorder %s19, 1
      %p146 = por %p144, %p145
      %p147 = scmp.ne.s32.totalorder %s139, %s142
      %p148 = scmp.eq.s32.totalorder %s19, 0
      %p149 = por %p147, %p148
      %p150 = scmp.ne.s32.totalorder %s139, %s142
      %p151 = scmp.eq.s32.totalorder %s24, 1
      %p152 = por %p150, %p151
      %p153 = scmp.ne.s32.totalorder %s142, %s143
      %p154 = scmp.eq.s32.totalorder %s24, 0
      %p155 = por %p153, %p154
      %p156 = scmp.ne.s32.totalorder %s142, %s143
      %p157 = scmp.eq.s32.totalorder %s25, 1
      %p158 = por %p156, %p157
      %p160 = scmp.ne.s32.totalorder %s143, %s159
      %p161 = scmp.eq.s32.totalorder %s25, 0
      %p162 = por %p160, %p161
      %p163 = scmp.le.s32.totalorder 1, %s19
      %p164 = scmp.lt.s32.totalorder %s19, 3
      %p165 = pnand %p163, %p164
      %p166 = pneg %p165
      // Predicated region
      $region9: #{tpu_custom_call.1} parent=5 // pred_check
        _
      $region10: #{tpu_custom_call.1} parent=5 // pred_check_branch
        %168 = sbr.rel (%p165) target = $region12
      $region11: #{tpu_custom_call.1} parent=5 // pred_region
        %s169 = ssub.s32 %s19, 1
        // Predicated region
        $region13: #{tpu_custom_call.1} parent=11 // pred_check
          %p170 = pneg %p106
        $region14: #{tpu_custom_call.1} parent=11 // pred_check_branch
          %172 = sbr.rel (%p170) target = $region16
        $region15: #{tpu_custom_call.1} parent=11 // pred_region
          %s174 = ssub.s32 256, 256
          %175 = vsyncadd [#allocation6], %s174
          %s176 = sshll.u32 [#allocation7], 4
          %s177 = int_to_ptr.vmem [resolvable:$true] %s176
          %182 = dma.hbm_to_vmem [thread:$0]  %s2, 256, %s177, [#allocation6], 64, 64, 4
        $region16: #{tpu_custom_call.1} parent=11 // pred_fallthru
          _
        // Predicated region
        $region17: #{tpu_custom_call.1} parent=11 // pred_check
          %p183 = pneg %p127
        $region18: #{tpu_custom_call.1} parent=11 // pred_check_branch
          %185 = sbr.rel (%p183) target = $region20
        $region19: #{tpu_custom_call.1} parent=11 // pred_region
          _
        $region20: #{tpu_custom_call.1} parent=11 // pred_fallthru
          _
      $region12: #{tpu_custom_call.1} parent=5 // pred_fallthru
        _
      %p186 = scmp.lt.s32.totalorder %s19, 2
      // Predicated region
      $region21: #{tpu_custom_call.1} parent=5 // pred_check
        %p187 = pneg %p186
      $region22: #{tpu_custom_call.1} parent=5 // pred_check_branch
        %189 = sbr.rel (%p187) target = $region24
      $region23: #{tpu_custom_call.1} parent=5 // pred_region
        // Predicated region
        $region25: #{tpu_custom_call.1} parent=23 // pred_check
          %p190 = pneg %p53
        $region26: #{tpu_custom_call.1} parent=23 // pred_check_branch
          %192 = sbr.rel (%p190) target = $region28
        $region27: #{tpu_custom_call.1} parent=23 // pred_region
          %s193 = sand.u32 %s43, 1
          %s194 = scalar_lea.sflag [#allocation3], %s193
          %s195 = sand.u32 %s43, 1
          %s196 = smul.addr %s195, 8
          %s197 = scalar_lea.vmem [#allocation2], %s196
          %s199 = ssub.s32 128, 128
          %200 = vsyncadd %s194, %s199
          %s201 = sadd.s32 %s27, %s26
          %s202 = smul.addr %s201, 128
          %s203 = scalar_lea.hbm %s0, %s202
          %s205 = sshll.u32 %s197, 4
          %s206 = int_to_ptr.vmem [resolvable:$true] %s205
          %208 = dma.hbm_to_vmem [thread:$0]  %s203, 128, %s206, %s194
        $region28: #{tpu_custom_call.1} parent=23 // pred_fallthru
          _
        // Predicated region
        $region29: #{tpu_custom_call.1} parent=23 // pred_check
          %p209 = pneg %p79
        $region30: #{tpu_custom_call.1} parent=23 // pred_check_branch
          %211 = sbr.rel (%p209) target = $region32
        $region31: #{tpu_custom_call.1} parent=23 // pred_region
          %s212 = sand.u32 %s19, 1
          %s213 = scalar_lea.sflag [#allocation6], %s212
          %s214 = sand.u32 %s69, 1
          %s215 = smul.addr %s214, 8
          %s216 = scalar_lea.vmem [#allocation5], %s215
          %s218 = ssub.s32 128, 128
          %219 = vsyncadd %s213, %s218
          %s220 = smul.addr %s26, 128
          %s221 = scalar_lea.hbm %s1, %s220
          %s223 = sshll.u32 %s216, 4
          %s224 = int_to_ptr.vmem [resolvable:$true] %s223
          %226 = dma.hbm_to_vmem [thread:$0]  %s221, 128, %s224, %s213
        $region32: #{tpu_custom_call.1} parent=23 // pred_fallthru
          _
      $region24: #{tpu_custom_call.1} parent=5 // pred_fallthru
        _
      %p227 = scmp.le.s32.totalorder 1, %s19
      %p228 = scmp.lt.s32.totalorder %s19, 3
      %p229 = pnand %p227, %p228
      %p230 = pneg %p229
      // Predicated region
      $region33: #{tpu_custom_call.1} parent=5 // pred_check
        _
      $region34: #{tpu_custom_call.1} parent=5 // pred_check_branch
        %232 = sbr.rel (%p229) target = $region36
      $region35: #{tpu_custom_call.1} parent=5 // pred_region
        %s233 = ssub.s32 %s19, 1
        %s234 = sand.u32 %s46, 1
        %s235 = scalar_lea.sflag [#allocation3], %s234
        %s236 = sand.u32 %s46, 1
        %s237 = smul.addr %s236, 8
        %s238 = scalar_lea.vmem [#allocation2], %s237
        // Predicated region
        $region37: #{tpu_custom_call.1} parent=35 // pred_check
          %p239 = pneg %p59
        $region38: #{tpu_custom_call.1} parent=35 // pred_check_branch
          %241 = sbr.rel (%p239) target = $region40
        $region39: #{tpu_custom_call.1} parent=35 // pred_region
          %242 = dma.done %s235, 128
        $region40: #{tpu_custom_call.1} parent=35 // pred_fallthru
          _
        %s243 = sand.u32 %s24, 1
        %s244 = scalar_lea.sflag [#allocation6], %s243
        %s245 = sand.u32 %s72, 1
        %s246 = smul.addr %s245, 8
        %s247 = scalar_lea.vmem [#allocation5], %s246
        // Predicated region
        $region41: #{tpu_custom_call.1} parent=35 // pred_check
          %p248 = pneg %p85
        $region42: #{tpu_custom_call.1} parent=35 // pred_check_branch
          %250 = sbr.rel (%p248) target = $region44
        $region43: #{tpu_custom_call.1} parent=35 // pred_region
          %251 = dma.done %s244, 128
        $region44: #{tpu_custom_call.1} parent=35 // pred_fallthru
          _
        // Predicated region
        $region45: #{tpu_custom_call.1} parent=35 // pred_check
          %p252 = pneg %p106
        $region46: #{tpu_custom_call.1} parent=35 // pred_check_branch
          %254 = sbr.rel (%p252) target = $region48
        $region47: #{tpu_custom_call.1} parent=35 // pred_region
          %255 = dma.done [#allocation6], 256
        $region48: #{tpu_custom_call.1} parent=35 // pred_fallthru
          _
        %s256 = sand.u32 %s46, 1
        %s257 = scalar_lea.sflag [#allocation3], %s256
        %s258 = sand.u32 %s46, 1
        %s259 = smul.addr %s258, 8
        %s260 = scalar_lea.vmem [#allocation2], %s259
        %p261 = pneg %p59
        %p262 = pneg %p56
        %s263 = sand.u32 %s24, 1
        %s264 = scalar_lea.sflag [#allocation6], %s263
        %s265 = sand.u32 %s72, 1
        %s266 = smul.addr %s265, 8
        %s267 = scalar_lea.vmem [#allocation5], %s266
        %p268 = pneg %p85
        %p269 = pneg %p82
        %p270 = pneg %p106
        %p271 = pneg %p103
        %p272 = pneg %p127
        %p273 = pneg %p124
        %p274 = pneg %p155
        %p275 = pneg %p152
        %s276 = sand.u32 %s142, 1
        %s277 = scalar_lea.sflag [#allocation4], %s276
        %s278 = sand.u32 %s142, 1
        %s279 = smul.addr %s278, 8
        %s280 = scalar_lea.vmem [#allocation8], %s279
        %v282 = vld [vmem:[%s247] sm:$0xff]
        %v283 = vpack.c.bf16 %v282, %v282
        %v284 = vld [vmem:[#allocation7] sm:$0xf]
        %v285 = vld [vmem:[#allocation7 + $0x4] sm:$0xf]
        %v286 = vld [vmem:[#allocation7 + $0x8] sm:$0xf]
        %v287 = vld [vmem:[#allocation7 + $0xc] sm:$0xf]
        %v292 = vunpack.c.l.b16 %v284
        %v293 = vunpack.c.l.b16 %v285
        %v294 = vunpack.c.l.b16 %v286
        %v295 = vunpack.c.l.b16 %v287
        %v296 = vpack.c.b16 %v293, %v292
        %v297 = vpack.c.b16 %v295, %v294
        %vm300 = vcmask 261120
        %v302 = vsel %vm300, %v283, 0
        %304 = vmatprep.subr.bf16.mxu0 0
        %305 = vmatpush1.bf16.msra.mxu0 %v296
        %306 = vmatprep.subr.bf16.mxu0 0
        %307 = vmatpush1.bf16.msra.mxu0 %v297
        %308 = vmatprep.subr.bf16.mxu0 0
        %309 = vmatpush1.bf16.msra.mxu0 0
        %310 = vmatprep.subr.bf16.mxu0 0
        %311 = vmatpush1.bf16.msra.mxu0 0
        %312 = vmatprep.subr.bf16.mxu0 0
        %313 = vmatpush1.bf16.msra.mxu0 0
        %314 = vmatprep.subr.bf16.mxu0 0
        %315 = vmatpush1.bf16.msra.mxu0 0
        %316 = vmatprep.subr.bf16.mxu0 0
        %317 = vmatpush1.bf16.msra.mxu0 0
        %318 = vmatprep.subr.bf16.mxu0 0
        %319 = vmatpush1.bf16.msra.mxu0 0
        %320 = vmatprep.subr.bf16.mxu0 0
        %321 = vmatpush1.bf16.msra.mxu0 0
        %322 = vmatprep.subr.bf16.mxu0 0
        %323 = vmatpush1.bf16.msra.mxu0 0
        %324 = vmatprep.subr.bf16.mxu0 0
        %325 = vmatpush1.bf16.msra.mxu0 0
        %326 = vmatprep.subr.bf16.mxu0 0
        %327 = vmatpush1.bf16.msra.mxu0 0
        %328 = vmatprep.subr.bf16.mxu0 0
        %329 = vmatpush1.bf16.msra.mxu0 0
        %330 = vmatprep.subr.bf16.mxu0 0
        %331 = vmatpush1.bf16.msra.mxu0 0
        %332 = vmatprep.subr.bf16.mxu0 0
        %333 = vmatpush1.bf16.msra.mxu0 0
        %334 = vmatprep.subr.bf16.mxu0 0
        %335 = vmatpush1.bf16.msra.mxu0 0
        %336 = vmatprep.mubr.bf16.mxu0 0
        %337 = vmatmul.mubr.bf16.gmra.mrb[0].mxu0 %v302
        %v338 = vpop.f32.mrb[0].mxu0
        %v339 = vadd.f32 0.0, %v338
        %v340 = vpop.f32.mrb[0].mxu0
        %v341 = vpop.f32.mrb[0].mxu0
        %v342 = vpop.f32.mrb[0].mxu0
        %343 = vdwg.mxu0
        %v344 = vlaneseq
        %v345 = vand.u32 %v344, 127
        %vm346 = vcmp.eq.s32.totalorder %v345, 32
        %v347 = vsel %vm346, 1.0, %v339
        %v348 = vpack.c.bf16 %v347, %v347
        %v349 = vld [vmem:[%s238] sm:$0xff]
        %v350 = vpack.c.bf16 %v349, %v349
        %vm351 = vcmask 64512
        %v353 = vsel %vm351, %v350, 0
        %vm355 = vcmask 1043456
        %v357 = vsel %vm355, %v348, 0
        %359 = vmatprep.subr.bf16.mxu0 0
        %360 = vmatpush1.bf16.msra.mxu0 %v357
        %361 = vmatprep.subr.bf16.mxu0 0
        %362 = vmatpush1.bf16.msra.mxu0 0
        %363 = vmatprep.subr.bf16.mxu0 0
        %364 = vmatpush1.bf16.msra.mxu0 0
        %365 = vmatprep.subr.bf16.mxu0 0
        %366 = vmatpush1.bf16.msra.mxu0 0
        %367 = vmatprep.subr.bf16.mxu0 0
        %368 = vmatpush1.bf16.msra.mxu0 0
        %369 = vmatprep.subr.bf16.mxu0 0
        %370 = vmatpush1.bf16.msra.mxu0 0
        %371 = vmatprep.subr.bf16.mxu0 0
        %372 = vmatpush1.bf16.msra.mxu0 0
        %373 = vmatprep.subr.bf16.mxu0 0
        %374 = vmatpush1.bf16.msra.mxu0 0
        %375 = vmatprep.subr.bf16.mxu0 0
        %376 = vmatpush1.bf16.msra.mxu0 0
        %377 = vmatprep.subr.bf16.mxu0 0
        %378 = vmatpush1.bf16.msra.mxu0 0
        %379 = vmatprep.subr.bf16.mxu0 0
        %380 = vmatpush1.bf16.msra.mxu0 0
        %381 = vmatprep.subr.bf16.mxu0 0
        %382 = vmatpush1.bf16.msra.mxu0 0
        %383 = vmatprep.subr.bf16.mxu0 0
        %384 = vmatpush1.bf16.msra.mxu0 0
        %385 = vmatprep.subr.bf16.mxu0 0
        %386 = vmatpush1.bf16.msra.mxu0 0
        %387 = vmatprep.subr.bf16.mxu0 0
        %388 = vmatpush1.bf16.msra.mxu0 0
        %389 = vmatprep.subr.bf16.mxu0 0
        %390 = vmatpush1.bf16.msra.mxu0 0
        %391 = vmatprep.mubr.bf16.mxu0 0
        %392 = vmatmul.mubr.bf16.gmra.mrb[0].mxu0 %v353
        %v393 = vpop.f32.mrb[0].mxu0
        %v394 = vadd.f32 0.0, %v393
        %v395 = vpop.f32.mrb[0].mxu0
        %v396 = vpop.f32.mrb[0].mxu0
        %v397 = vpop.f32.mrb[0].mxu0
        %398 = vdwg.mxu0
        %v399 = vadd.f32 %v394, 1.0
        %v400 = vrcp.pop %v399
        %v401 = vld [vmem:[%s3] sm:$0x1]
        %v403 = vlaneseq
        %v404 = vshrl.u32 %v403, 7
        %v405 = vsub.s32 0, %v404
        %v406 = vrot.slane %v401, %v405
        %v408 = vadd.f32 %v394, %v406
        %410 = vset.pattern.permute.xlu0 32
        %411 = vperm.xlu0 %410, %v400
        %v412 = vpop.permute.xlu0 %411
        %v414 = vmul.f32 %v408, %v412
        %415 = vst [vmem:[%s280] sm:$0xff] %v414
        %s416 = sand.u32 %s142, 1
        %s417 = scalar_lea.sflag [#allocation4], %s416
        %s418 = sand.u32 %s142, 1
        %s419 = smul.addr %s418, 8
        %s420 = scalar_lea.vmem [#allocation8], %s419
        // Predicated region
        $region49: #{tpu_custom_call.1} parent=35 // pred_check
          %p421 = pneg %p152
        $region50: #{tpu_custom_call.1} parent=35 // pred_check_branch
          %423 = sbr.rel (%p421) target = $region52
        $region51: #{tpu_custom_call.1} parent=35 // pred_region
          %s425 = ssub.s32 128, 128
          %426 = vsyncadd %s417, %s425
          %s427 = sadd.s32 %s29, %s28
          %s428 = smul.addr %s427, 128
          %s429 = scalar_lea.hbm %s4, %s428
          %s431 = sshll.u32 %s420, 4
          %s432 = int_to_ptr.vmem [resolvable:$true] %s431
          %434 = dma.vmem_to_hbm [thread:$0]  %s432, 128, %s429, %s417
        $region52: #{tpu_custom_call.1} parent=35 // pred_fallthru
          _
      $region36: #{tpu_custom_call.1} parent=5 // pred_fallthru
        _
      %p435 = scmp.le.s32.totalorder 2, %s19
      // Predicated region
      $region53: #{tpu_custom_call.1} parent=5 // pred_check
        %p436 = pneg %p435
      $region54: #{tpu_custom_call.1} parent=5 // pred_check_branch
        %438 = sbr.rel (%p436) target = $region56
      $region55: #{tpu_custom_call.1} parent=5 // pred_region
        %s439 = ssub.s32 %s19, 2
        // Predicated region
        $region57: #{tpu_custom_call.1} parent=55 // pred_check
          %p440 = pneg %p158
        $region58: #{tpu_custom_call.1} parent=55 // pred_check_branch
          %442 = sbr.rel (%p440) target = $region60
        $region59: #{tpu_custom_call.1} parent=55 // pred_region
          %s443 = sand.u32 %s143, 1
          %s444 = scalar_lea.sflag [#allocation4], %s443
          %s445 = sand.u32 %s143, 1
          %s446 = smul.addr %s445, 8
          %s447 = scalar_lea.vmem [#allocation8], %s446
          %448 = dma.done %s444, 128
        $region60: #{tpu_custom_call.1} parent=55 // pred_fallthru
          _
      $region56: #{tpu_custom_call.1} parent=5 // pred_fallthru
        _
    $region6: #{tpu_custom_call.1} parent=1 // loop_footer
      %s23 = sadd.s32 1, %s19
    $region7: #{tpu_custom_call.1} parent=1 // loop_footer_branch
      %18 = sbr.rel target = $region3
    $region8: #{tpu_custom_call.1} parent=1 // loop_exit
      _
    %449 = vsyncpa [#allocation3], 1
    %s450 = scalar_lea.sflag [#allocation3], 1
    %451 = vsyncpa %s450, 1
    %452 = vsyncpa [#allocation6], 1
    %s453 = scalar_lea.sflag [#allocation6], 1
    %454 = vsyncpa %s453, 1
    %455 = vsyncpa [#allocation4], 1
    %s456 = scalar_lea.sflag [#allocation4], 1
    %457 = vsyncpa %s456, 1

// kernel: tpu_custom_call.1
$region0: #{tpu_custom_call.1}
  #allocation0 [shape = 'u32[]', space=smem, size = 0x4, offset = 0x4, fixed_abs, tag = 'smem constant byte address 0x4 - core index']
  #allocation1 [shape = 'u32[144,128]{1,0:T(1,128)}', space=vmem, size = 0x12000, scoped, tag = 'internal scratch']
  %s0 = inlined_call_operand.hbm [shape: f32[2,8,8], index: 0, kind: input, shape index: {}]
  %s1 = inlined_call_operand.hbm [shape: f32[16,32], index: 1, kind: input, shape index: {}]
  %s2 = inlined_call_operand.hbm [shape: bf16[32,128], index: 2, kind: input, shape index: {}]
  %s3 = inlined_call_operand.vmem [shape: f32[1,128], index: 3, kind: input, shape index: {}]
  %s4 = inlined_call_operand.hbm [shape: f32[2,8,128], index: 4, kind: output, shape index: {}]
  %s5 = sld [smem:[#allocation0]]
  $region61: #{tpu_custom_call.1} parent=0
    _
  %s7 = ssub.s32 1, %s5
  %s8 = scalar_select 0, %s7, %s5
  $region1: #{tpu_custom_call.1} parent=0
    #allocation2 [shape = 'u8[8192]{0}', space=vmem, size = 0x2000, scoped, tag = 'input window, operand 0']
    #allocation3 [shape = 's32[2]{0}', space=sflag, size = 0x8, scoped, tag = 'scoped memory for tpu_custom_call.1']
    #allocation4 [shape = 's32[2]{0}', space=sflag, size = 0x8, scoped, tag = 'scoped memory for tpu_custom_call.1']
    #allocation5 [shape = 'u8[8192]{0}', space=vmem, size = 0x2000, scoped, tag = 'input window, operand 1']
    #allocation6 [shape = 's32[2]{0}', space=sflag, size = 0x8, scoped, tag = 'scoped memory for tpu_custom_call.1']
    #allocation7 [shape = 'u8[8192]{0}', space=vmem, size = 0x2000, scoped, tag = 'input window, operand 2, single buffered']
    #allocation8 [shape = 'u8[8192]{0}', space=vmem, size = 0x2000, scoped, tag = 'output window, operand 0']
    %9 = vsyncpa [#allocation3], 0
    %s10 = scalar_lea.sflag [#allocation3], 1
    %11 = vsyncpa %s10, 0
    %12 = vsyncpa [#allocation6], 0
    %s13 = scalar_lea.sflag [#allocation6], 1
    %14 = vsyncpa %s13, 0
    %15 = vsyncpa [#allocation4], 0
    %s16 = scalar_lea.sflag [#allocation4], 1
    %17 = vsyncpa %s16, 0
    loop: start=0, step=1, limit=4
    $region2: #{tpu_custom_call.1} parent=1 // loop_pre_header
      _
    $region3: #{tpu_custom_call.1} parent=1 // loop_header
      %s19 = sphi 0, %s23
      %p20 = scmp.ge.s32.totalorder %s19, 4
      %s26 = sphi 0, %s38
      %s27 = sphi 0, %s34
      %s28 = sphi 0, %s26
      %s29 = sphi 0, %s27
      %s30 = sphi 0, %s28
      %s31 = sphi 0, %s29
      %s43 = sphi 0, %s45
      %s46 = sphi 0, %s43
      %s47 = sphi 0, %s46
      %s63 = sphi 0, %s47
      %s69 = sphi 0, %s71
      %s72 = sphi 0, %s69
      %s73 = sphi 0, %s72
      %s89 = sphi 0, %s73
      %s93 = sphi 0, %s93
      %s95 = sphi 0, %s93
      %s96 = sphi 0, %s95
      %s110 = sphi 0, %s96
      %s114 = sphi 0, %s114
      %s116 = sphi 0, %s114
      %s117 = sphi 0, %s116
      %s131 = sphi 0, %s117
      %s139 = sphi 0, %s141
      %s142 = sphi 0, %s139
      %s143 = sphi 0, %s142
      %s159 = sphi 0, %s143
    $region4: #{tpu_custom_call.1} parent=1 // loop_header_branch
      %22 = sbr.rel (%p20) target = $region8
    $region5: #{tpu_custom_call.1} parent=1 // loop_body
      %s24 = ssub.s32 %s19, 1
      %s25 = ssub.s32 %s19, 2
      %s32 = sadd.s32 1, %s27
      %p33 = scmp.ge.s32.totalorder %s32, 1
      %s34 = scalar_select %p33, 0, %s32
      %s35 = sadd.s32 1, %s26
      %s36 = scalar_select %p33, %s35, %s26
      %p37 = scmp.ge.s32.totalorder %s36, 2
      %s38 = scalar_select %p37, 0, %s36
      %s39 = ssub.s32 %s26, %s38
      %s40 = ssub.s32 %s27, %s34
      %s41 = sor.u32 %s39, %s40
      %p42 = scmp.eq.s32.totalorder %s41, 0
      %s44 = sadd.s32 %s43, 1
      %s45 = scalar_select %p42, %s43, %s44
      %p48 = pneg %p42
      %p49 = scmp.eq.s32.totalorder %s19, 1
      %p50 = por %p48, %p49
      %p51 = scmp.ne.s32.totalorder %s43, %s46
      %p52 = scmp.eq.s32.totalorder %s19, 0
      %p53 = por %p51, %p52
      %p54 = scmp.ne.s32.totalorder %s43, %s46
      %p55 = scmp.eq.s32.totalorder %s24, 1
      %p56 = por %p54, %p55
      %p57 = scmp.ne.s32.totalorder %s46, %s47
      %p58 = scmp.eq.s32.totalorder %s24, 0
      %p59 = por %p57, %p58
      %p60 = scmp.ne.s32.totalorder %s46, %s47
      %p61 = scmp.eq.s32.totalorder %s25, 1
      %p62 = por %p60, %p61
      %p64 = scmp.ne.s32.totalorder %s47, %s63
      %p65 = scmp.eq.s32.totalorder %s25, 0
      %p66 = por %p64, %p65
      %s67 = ssub.s32 %s26, %s38
      %p68 = scmp.eq.s32.totalorder %s67, 0
      %s70 = sadd.s32 %s69, 1
      %s71 = scalar_select %p68, %s69, %s70
      %p74 = pneg %p68
      %p75 = scmp.eq.s32.totalorder %s19, 1
      %p76 = por %p74, %p75
      %p77 = scmp.ne.s32.totalorder %s69, %s72
      %p78 = scmp.eq.s32.totalorder %s19, 0
      %p79 = por %p77, %p78
      %p80 = scmp.ne.s32.totalorder %s69, %s72
      %p81 = scmp.eq.s32.totalorder %s24, 1
      %p82 = por %p80, %p81
      %p83 = scmp.ne.s32.totalorder %s72, %s73
      %p84 = scmp.eq.s32.totalorder %s24, 0
      %p85 = por %p83, %p84
      %p86 = scmp.ne.s32.totalorder %s72, %s73
      %p87 = scmp.eq.s32.totalorder %s25, 1
      %p88 = por %p86, %p87
      %p90 = scmp.ne.s32.totalorder %s73, %s89
      %p91 = scmp.eq.s32.totalorder %s25, 0
      %p92 = por %p90, %p91
      %s94 = sadd.s32 %s93, 1
      %p97 = scmp.eq.s32.totalorder %s19, 1
      %p98 = scmp.ne.s32.totalorder %s93, %s95
      %p99 = scmp.eq.s32.totalorder %s19, 0
      %p100 = por %p98, %p99
      %p101 = scmp.ne.s32.totalorder %s93, %s95
      %p102 = scmp.eq.s32.totalorder %s24, 1
      %p103 = por %p101, %p102
      %p104 = scmp.ne.s32.totalorder %s95, %s96
      %p105 = scmp.eq.s32.totalorder %s24, 0
      %p106 = por %p104, %p105
      %p107 = scmp.ne.s32.totalorder %s95, %s96
      %p108 = scmp.eq.s32.totalorder %s25, 1
      %p109 = por %p107, %p108
      %p111 = scmp.ne.s32.totalorder %s96, %s110
      %p112 = scmp.eq.s32.totalorder %s25, 0
      %p113 = por %p111, %p112
      %s115 = sadd.s32 %s114, 1
      %p118 = scmp.eq.s32.totalorder %s19, 1
      %p119 = scmp.ne.s32.totalorder %s114, %s116
      %p120 = scmp.eq.s32.totalorder %s19, 0
      %p121 = por %p119, %p120
      %p122 = scmp.ne.s32.totalorder %s114, %s116
      %p123 = scmp.eq.s32.totalorder %s24, 1
      %p124 = por %p122, %p123
      %p125 = scmp.ne.s32.totalorder %s116, %s117
      %p126 = scmp.eq.s32.totalorder %s24, 0
      %p127 = por %p125, %p126
      %p128 = scmp.ne.s32.totalorder %s116, %s117
      %p129 = scmp.eq.s32.totalorder %s25, 1
      %p130 = por %p128, %p129
      %p132 = scmp.ne.s32.totalorder %s117, %s131
      %p133 = scmp.eq.s32.totalorder %s25, 0
      %p134 = por %p132, %p133
      %s135 = ssub.s32 %s26, %s38
      %s136 = ssub.s32 %s27, %s34
      %s137 = sor.u32 %s135, %s136
      %p138 = scmp.eq.s32.totalorder %s137, 0
      %s140 = sadd.s32 %s139, 1
      %s141 = scalar_select %p138, %s139, %s140
      %p144 = pneg %p138
      %p145 = scmp.eq.s32.totalorder %s19, 1
      %p146 = por %p144, %p145
      %p147 = scmp.ne.s32.totalorder %s139, %s142
      %p148 = scmp.eq.s32.totalorder %s19, 0
      %p149 = por %p147, %p148
      %p150 = scmp.ne.s32.totalorder %s139, %s142
      %p151 = scmp.eq.s32.totalorder %s24, 1
      %p152 = por %p150, %p151
      %p153 = scmp.ne.s32.totalorder %s142, %s143
      %p154 = scmp.eq.s32.totalorder %s24, 0
      %p155 = por %p153, %p154
      %p156 = scmp.ne.s32.totalorder %s142, %s143
      %p157 = scmp.eq.s32.totalorder %s25, 1
      %p158 = por %p156, %p157
      %p160 = scmp.ne.s32.totalorder %s143, %s159
      %p161 = scmp.eq.s32.totalorder %s25, 0
      %p162 = por %p160, %p161
      %p163 = scmp.le.s32.totalorder 1, %s19
      %p164 = scmp.lt.s32.totalorder %s19, 3
      %p165 = pnand %p163, %p164
      %p166 = pneg %p165
      // Predicated region
      $region9: #{tpu_custom_call.1} parent=5 // pred_check
        _
      $region10: #{tpu_custom_call.1} parent=5 // pred_check_branch
        %168 = sbr.rel (%p165) target = $region12
      $region11: #{tpu_custom_call.1} parent=5 // pred_region
        %s169 = ssub.s32 %s19, 1
        // Predicated region
        $region13: #{tpu_custom_call.1} parent=11 // pred_check
          %p170 = pneg %p106
        $region14: #{tpu_custom_call.1} parent=11 // pred_check_branch
          %172 = sbr.rel (%p170) target = $region16
        $region15: #{tpu_custom_call.1} parent=11 // pred_region
          %s174 = ssub.s32 256, 256
          %175 = vsyncadd [#allocation6], %s174
          %s176 = sshll.u32 [#allocation7], 4
          %s177 = int_to_ptr.vmem [resolvable:$true] %s176
          %182 = dma.hbm_to_vmem [thread:$0]  %s2, 256, %s177, [#allocation6], 64, 64, 4
        $region16: #{tpu_custom_call.1} parent=11 // pred_fallthru
          _
        // Predicated region
        $region17: #{tpu_custom_call.1} parent=11 // pred_check
          %p183 = pneg %p127
        $region18: #{tpu_custom_call.1} parent=11 // pred_check_branch
          %185 = sbr.rel (%p183) target = $region20
        $region19: #{tpu_custom_call.1} parent=11 // pred_region
          _
        $region20: #{tpu_custom_call.1} parent=11 // pred_fallthru
          _
      $region12: #{tpu_custom_call.1} parent=5 // pred_fallthru
        _
      %p186 = scmp.lt.s32.totalorder %s19, 2
      // Predicated region
      $region21: #{tpu_custom_call.1} parent=5 // pred_check
        %p187 = pneg %p186
      $region22: #{tpu_custom_call.1} parent=5 // pred_check_branch
        %189 = sbr.rel (%p187) target = $region24
      $region23: #{tpu_custom_call.1} parent=5 // pred_region
        // Predicated region
        $region25: #{tpu_custom_call.1} parent=23 // pred_check
          %p190 = pneg %p53
        $region26: #{tpu_custom_call.1} parent=23 // pred_check_branch
          %192 = sbr.rel (%p190) target = $region28
        $region27: #{tpu_custom_call.1} parent=23 // pred_region
          %s193 = sand.u32 %s43, 1
          %s194 = scalar_lea.sflag [#allocation3], %s193
          %s195 = sand.u32 %s43, 1
          %s196 = smul.addr %s195, 8
          %s197 = scalar_lea.vmem [#allocation2], %s196
          %s199 = ssub.s32 128, 128
          %200 = vsyncadd %s194, %s199
          %s201 = sadd.s32 %s27, %s26
          %s202 = smul.addr %s201, 128
          %s203 = scalar_lea.hbm %s0, %s202
          %s205 = sshll.u32 %s197, 4
          %s206 = int_to_ptr.vmem [resolvable:$true] %s205
          %208 = dma.hbm_to_vmem [thread:$0]  %s203, 128, %s206, %s194
        $region28: #{tpu_custom_call.1} parent=23 // pred_fallthru
          _
        // Predicated region
        $region29: #{tpu_custom_call.1} parent=23 // pred_check
          %p209 = pneg %p79
        $region30: #{tpu_custom_call.1} parent=23 // pred_check_branch
          %211 = sbr.rel (%p209) target = $region32
        $region31: #{tpu_custom_call.1} parent=23 // pred_region
          %s212 = sand.u32 %s19, 1
          %s213 = scalar_lea.sflag [#allocation6], %s212
          %s214 = sand.u32 %s69, 1
          %s215 = smul.addr %s214, 8
          %s216 = scalar_lea.vmem [#allocation5], %s215
          %s218 = ssub.s32 128, 128
          %219 = vsyncadd %s213, %s218
          %s220 = smul.addr %s26, 128
          %s221 = scalar_lea.hbm %s1, %s220
          %s223 = sshll.u32 %s216, 4
          %s224 = int_to_ptr.vmem [resolvable:$true] %s223
          %226 = dma.hbm_to_vmem [thread:$0]  %s221, 128, %s224, %s213
        $region32: #{tpu_custom_call.1} parent=23 // pred_fallthru
          _
      $region24: #{tpu_custom_call.1} parent=5 // pred_fallthru
        _
      %p227 = scmp.le.s32.totalorder 1, %s19
      %p228 = scmp.lt.s32.totalorder %s19, 3
      %p229 = pnand %p227, %p228
      %p230 = pneg %p229
      // Predicated region
      $region33: #{tpu_custom_call.1} parent=5 // pred_check
        _
      $region34: #{tpu_custom_call.1} parent=5 // pred_check_branch
        %232 = sbr.rel (%p229) target = $region36
      $region35: #{tpu_custom_call.1} parent=5 // pred_region
        %s233 = ssub.s32 %s19, 1
        %s234 = sand.u32 %s46, 1
        %s235 = scalar_lea.sflag [#allocation3], %s234
        %s236 = sand.u32 %s46, 1
        %s237 = smul.addr %s236, 8
        %s238 = scalar_lea.vmem [#allocation2], %s237
        // Predicated region
        $region37: #{tpu_custom_call.1} parent=35 // pred_check
          %p239 = pneg %p59
        $region38: #{tpu_custom_call.1} parent=35 // pred_check_branch
          %241 = sbr.rel (%p239) target = $region40
        $region39: #{tpu_custom_call.1} parent=35 // pred_region
          %242 = dma.done %s235, 128
        $region40: #{tpu_custom_call.1} parent=35 // pred_fallthru
          _
        %s243 = sand.u32 %s24, 1
        %s244 = scalar_lea.sflag [#allocation6], %s243
        %s245 = sand.u32 %s72, 1
        %s246 = smul.addr %s245, 8
        %s247 = scalar_lea.vmem [#allocation5], %s246
        // Predicated region
        $region41: #{tpu_custom_call.1} parent=35 // pred_check
          %p248 = pneg %p85
        $region42: #{tpu_custom_call.1} parent=35 // pred_check_branch
          %250 = sbr.rel (%p248) target = $region44
        $region43: #{tpu_custom_call.1} parent=35 // pred_region
          %251 = dma.done %s244, 128
        $region44: #{tpu_custom_call.1} parent=35 // pred_fallthru
          _
        // Predicated region
        $region45: #{tpu_custom_call.1} parent=35 // pred_check
          %p252 = pneg %p106
        $region46: #{tpu_custom_call.1} parent=35 // pred_check_branch
          %254 = sbr.rel (%p252) target = $region48
        $region47: #{tpu_custom_call.1} parent=35 // pred_region
          %255 = dma.done [#allocation6], 256
        $region48: #{tpu_custom_call.1} parent=35 // pred_fallthru
          _
        %s256 = sand.u32 %s46, 1
        %s257 = scalar_lea.sflag [#allocation3], %s256
        %s258 = sand.u32 %s46, 1
        %s259 = smul.addr %s258, 8
        %s260 = scalar_lea.vmem [#allocation2], %s259
        %p261 = pneg %p59
        %p262 = pneg %p56
        %s263 = sand.u32 %s24, 1
        %s264 = scalar_lea.sflag [#allocation6], %s263
        %s265 = sand.u32 %s72, 1
        %s266 = smul.addr %s265, 8
        %s267 = scalar_lea.vmem [#allocation5], %s266
        %p268 = pneg %p85
        %p269 = pneg %p82
        %p270 = pneg %p106
        %p271 = pneg %p103
        %p272 = pneg %p127
        %p273 = pneg %p124
        %p274 = pneg %p155
        %p275 = pneg %p152
        %s276 = sand.u32 %s142, 1
        %s277 = scalar_lea.sflag [#allocation4], %s276
        %s278 = sand.u32 %s142, 1
        %s279 = smul.addr %s278, 8
        %s280 = scalar_lea.vmem [#allocation8], %s279
        %v282 = vld [vmem:[%s247] sm:$0xff]
        %v283 = vpack.c.bf16 %v282, %v282
        %v284 = vld [vmem:[#allocation7] sm:$0xf]
        %v285 = vld [vmem:[#allocation7 + $0x4] sm:$0xf]
        %v286 = vld [vmem:[#allocation7 + $0x8] sm:$0xf]
        %v287 = vld [vmem:[#allocation7 + $0xc] sm:$0xf]
        %v292 = vunpack.c.l.b16 %v284
        %v293 = vunpack.c.l.b16 %v285
        %v294 = vunpack.c.l.b16 %v286
        %v295 = vunpack.c.l.b16 %v287
        %v296 = vpack.c.b16 %v293, %v292
        %v297 = vpack.c.b16 %v295, %v294
        %vm300 = vcmask 261120
        %v302 = vsel %vm300, %v283, 0
        %304 = vmatprep.subr.bf16.mxu0 0
        %305 = vmatpush1.bf16.msra.mxu0 %v296
        %306 = vmatprep.subr.bf16.mxu0 0
        %307 = vmatpush1.bf16.msra.mxu0 %v297
        %308 = vmatprep.subr.bf16.mxu0 0
        %309 = vmatpush1.bf16.msra.mxu0 0
        %310 = vmatprep.subr.bf16.mxu0 0
        %311 = vmatpush1.bf16.msra.mxu0 0
        %312 = vmatprep.subr.bf16.mxu0 0
        %313 = vmatpush1.bf16.msra.mxu0 0
        %314 = vmatprep.subr.bf16.mxu0 0
        %315 = vmatpush1.bf16.msra.mxu0 0
        %316 = vmatprep.subr.bf16.mxu0 0
        %317 = vmatpush1.bf16.msra.mxu0 0
        %318 = vmatprep.subr.bf16.mxu0 0
        %319 = vmatpush1.bf16.msra.mxu0 0
        %320 = vmatprep.subr.bf16.mxu0 0
        %321 = vmatpush1.bf16.msra.mxu0 0
        %322 = vmatprep.subr.bf16.mxu0 0
        %323 = vmatpush1.bf16.msra.mxu0 0
        %324 = vmatprep.subr.bf16.mxu0 0
        %325 = vmatpush1.bf16.msra.mxu0 0
        %326 = vmatprep.subr.bf16.mxu0 0
        %327 = vmatpush1.bf16.msra.mxu0 0
        %328 = vmatprep.subr.bf16.mxu0 0
        %329 = vmatpush1.bf16.msra.mxu0 0
        %330 = vmatprep.subr.bf16.mxu0 0
        %331 = vmatpush1.bf16.msra.mxu0 0
        %332 = vmatprep.subr.bf16.mxu0 0
        %333 = vmatpush1.bf16.msra.mxu0 0
        %334 = vmatprep.subr.bf16.mxu0 0
        %335 = vmatpush1.bf16.msra.mxu0 0
        %336 = vmatprep.mubr.bf16.mxu0 0
        %337 = vmatmul.mubr.bf16.gmra.mrb[0].mxu0 %v302
        %v338 = vpop.f32.mrb[0].mxu0
        %v339 = vadd.f32 0.0, %v338
        %v340 = vpop.f32.mrb[0].mxu0
        %v341 = vpop.f32.mrb[0].mxu0
        %v342 = vpop.f32.mrb[0].mxu0
        %343 = vdwg.mxu0
        %v344 = vlaneseq
        %v345 = vand.u32 %v344, 127
        %vm346 = vcmp.eq.s32.totalorder %v345, 32
        %v347 = vsel %vm346, 1.0, %v339
        %v348 = vpack.c.bf16 %v347, %v347
        %v349 = vld [vmem:[%s238] sm:$0xff]
        %v350 = vpack.c.bf16 %v349, %v349
        %vm351 = vcmask 64512
        %v353 = vsel %vm351, %v350, 0
        %vm355 = vcmask 1043456
        %v357 = vsel %vm355, %v348, 0
        %359 = vmatprep.subr.bf16.mxu0 0
        %360 = vmatpush1.bf16.msra.mxu0 %v357
        %361 = vmatprep.subr.bf16.mxu0 0
        %362 = vmatpush1.bf16.msra.mxu0 0
        %363 = vmatprep.subr.bf16.mxu0 0
        %364 = vmatpush1.bf16.msra.mxu0 0
        %365 = vmatprep.subr.bf16.mxu0 0
        %366 = vmatpush1.bf16.msra.mxu0 0
        %367 = vmatprep.subr.bf16.mxu0 0
        %368 = vmatpush1.bf16.msra.mxu0 0
        %369 = vmatprep.subr.bf16.mxu0 0
        %370 = vmatpush1.bf16.msra.mxu0 0
        %371 = vmatprep.subr.bf16.mxu0 0
        %372 = vmatpush1.bf16.msra.mxu0 0
        %373 = vmatprep.subr.bf16.mxu0 0
        %374 = vmatpush1.bf16.msra.mxu0 0
        %375 = vmatprep.subr.bf16.mxu0 0
        %376 = vmatpush1.bf16.msra.mxu0 0
        %377 = vmatprep.subr.bf16.mxu0 0
        %378 = vmatpush1.bf16.msra.mxu0 0
        %379 = vmatprep.subr.bf16.mxu0 0
        %380 = vmatpush1.bf16.msra.mxu0 0
        %381 = vmatprep.subr.bf16.mxu0 0
        %382 = vmatpush1.bf16.msra.mxu0 0
        %383 = vmatprep.subr.bf16.mxu0 0
        %384 = vmatpush1.bf16.msra.mxu0 0
        %385 = vmatprep.subr.bf16.mxu0 0
        %386 = vmatpush1.bf16.msra.mxu0 0
        %387 = vmatprep.subr.bf16.mxu0 0
        %388 = vmatpush1.bf16.msra.mxu0 0
        %389 = vmatprep.subr.bf16.mxu0 0
        %390 = vmatpush1.bf16.msra.mxu0 0
        %391 = vmatprep.mubr.bf16.mxu0 0
        %392 = vmatmul.mubr.bf16.gmra.mrb[0].mxu0 %v353
        %v393 = vpop.f32.mrb[0].mxu0
        %v394 = vadd.f32 0.0, %v393
        %v395 = vpop.f32.mrb[0].mxu0
        %v396 = vpop.f32.mrb[0].mxu0
        %v397 = vpop.f32.mrb[0].mxu0
        %398 = vdwg.mxu0
        %v399 = vadd.f32 %v394, 1.0
        %v400 = vrcp.pop %v399
        %v401 = vld [vmem:[%s3] sm:$0x1]
        %v403 = vlaneseq
        %v404 = vshrl.u32 %v403, 7
        %v405 = vsub.s32 0, %v404
        %v406 = vrot.slane %v401, %v405
        %v408 = vadd.f32 %v394, %v406
        %410 = vset.pattern.permute.xlu0 32
        %411 = vperm.xlu0 %410, %v400
        %v412 = vpop.permute.xlu0 %411
        %v414 = vmul.f32 %v408, %v412
        %415 = vst [vmem:[%s280] sm:$0xff] %v414
        %s416 = sand.u32 %s142, 1
        %s417 = scalar_lea.sflag [#allocation4], %s416
        %s418 = sand.u32 %s142, 1
        %s419 = smul.addr %s418, 8
        %s420 = scalar_lea.vmem [#allocation8], %s419
        // Predicated region
        $region49: #{tpu_custom_call.1} parent=35 // pred_check
          %p421 = pneg %p152
        $region50: #{tpu_custom_call.1} parent=35 // pred_check_branch
          %423 = sbr.rel (%p421) target = $region52
        $region51: #{tpu_custom_call.1} parent=35 // pred_region
          %s425 = ssub.s32 128, 128
          %426 = vsyncadd %s417, %s425
          %s427 = sadd.s32 %s29, %s28
          %s428 = smul.addr %s427, 128
          %s429 = scalar_lea.hbm %s4, %s428
          %s431 = sshll.u32 %s420, 4
          %s432 = int_to_ptr.vmem [resolvable:$true] %s431
          %434 = dma.vmem_to_hbm [thread:$0]  %s432, 128, %s429, %s417
        $region52: #{tpu_custom_call.1} parent=35 // pred_fallthru
          _
      $region36: #{tpu_custom_call.1} parent=5 // pred_fallthru
        _
      %p435 = scmp.le.s32.totalorder 2, %s19
      // Predicated region
      $region53: #{tpu_custom_call.1} parent=5 // pred_check
        %p436 = pneg %p435
      $region54: #{tpu_custom_call.1} parent=5 // pred_check_branch
        %438 = sbr.rel (%p436) target = $region56
      $region55: #{tpu_custom_call.1} parent=5 // pred_region
        %s439 = ssub.s32 %s19, 2
        // Predicated region
        $region57: #{tpu_custom_call.1} parent=55 // pred_check
          %p440 = pneg %p158
        $region58: #{tpu_custom_call.1} parent=55 // pred_check_branch
          %442 = sbr.rel (%p440) target = $region60
        $region59: #{tpu_custom_call.1} parent=55 // pred_region
          %s443 = sand.u32 %s143, 1
          %s444 = scalar_lea.sflag [#allocation4], %s443
          %s445 = sand.u32 %s143, 1
          %s446 = smul.addr %s445, 8
          %s447 = scalar_lea.vmem [#allocation8], %s446
          %448 = dma.done %s444, 128
        $region60: #{tpu_custom_call.1} parent=55 // pred_fallthru
          _
      $region56: #{tpu_custom_call.1} parent=5 // pred_fallthru
        _
    $region6: #{tpu_custom_call.1} parent=1 // loop_footer
      %s23 = sadd.s32 1, %s19
    $region7: #{tpu_custom_call.1} parent=1 // loop_footer_branch
      %18 = sbr.rel target = $region3
    $region8: #{tpu_custom_call.1} parent=1 // loop_exit
      _
    %449 = vsyncpa [#allocation3], 1
    %s450 = scalar_lea.sflag [#allocation3], 1
    %451 = vsyncpa %s450, 1
    %452 = vsyncpa [#allocation6], 1
    %s453 = scalar_lea.sflag [#allocation6], 1
    %454 = vsyncpa %s453, 1
    %455 = vsyncpa [#allocation4], 1
    %s456 = scalar_lea.sflag [#allocation4], 1
    %457 = vsyncpa %s456, 1

</llo_original>
